<compile_context>
chip_gen: v7x
topology: tpu7x:2x2x1
jax: 0.10.0
libtpu: 0.0.40
codegen_flags: <defaults>
</compile_context>

<pallas_src>
import math

import jax
import jax.numpy as jnp
from jax.experimental import pallas as pl
from jax.experimental.pallas import tpu as pltpu

_LANE = 128      # vreg lane width
_SUBLANE = 8     # vreg sublane count


# ---------------------------------------------------------------------------
# Table construction (host/XLA side, mirrors the PyTorch __init__)
# ---------------------------------------------------------------------------
def make_sinusoidal_table(num_embeddings: int, embedding_dim: int) -> jnp.ndarray:
    """Same construction as SinusoidalPositionalEmbedding.__init__ (float32)."""
    position = jnp.arange(num_embeddings, dtype=jnp.float32)[:, None]
    div_term = jnp.exp(
        jnp.arange(0, embedding_dim, 2, dtype=jnp.float32)
        * -(math.log(10000.0) / embedding_dim)
    )
    pe = jnp.zeros((num_embeddings, embedding_dim), dtype=jnp.float32)
    pe = pe.at[:, 0::2].set(jnp.sin(position * div_term))
    pe = pe.at[:, 1::2].set(jnp.cos(position * div_term))
    return pe


def make_learned_table(key, num_embeddings: int, embedding_dim: int) -> jnp.ndarray:
    """nn.Embedding default init: N(0, 1) weights."""
    return jax.random.normal(key, (num_embeddings, embedding_dim), dtype=jnp.float32)


# ---------------------------------------------------------------------------
# Pallas kernel
# ---------------------------------------------------------------------------
def _make_pos_emb_kernel(scale: float):
    def kernel(tab_ref, o_ref):
        # tab_ref: (tr, W) tile of the table plane.
        # o_ref:   (tr, W) (batch in the grid) or (b, tr, W) (batch folded).
        v = tab_ref[...]
        if scale != 1.0:                       # scale == 1.0 for this module
            v = v * jnp.asarray(scale, v.dtype)
        v = v.astype(o_ref.dtype)              # cast hidden under the output DMA
        o_ref[...] = jnp.broadcast_to(v, o_ref.shape)

    return kernel


# ---------------------------------------------------------------------------
# Layout / budget helpers
# ---------------------------------------------------------------------------
def _round_down(x: int, m: int) -> int:
    return (x // m) * m


def _round_up(x: int, m: int) -> int:
    return ((x + m - 1) // m) * m


def _vmem_capacity_bytes() -> int:
    try:
        return int(pltpu.get_tpu_info().vmem_capacity_bytes)
    except Exception:
        return 64 << 20        # conservative fallback: v7x per-TensorCore VMEM


# ---------------------------------------------------------------------------
# Forward
# ---------------------------------------------------------------------------
def positional_embedding_forward(
    x: jnp.ndarray, table: jnp.ndarray, *, scale: float = 1.0, out_dtype=None
) -> jnp.ndarray:
    """Pallas forward: returns (b, s, d) = table[arange(s)] broadcast over batch."""
    assert x.ndim > 1, "x must have at least 2 dims (batch, seq, ...)"
    b, s = int(x.shape[0]), int(x.shape[1])
    max_len, d = table.shape
    assert s <= max_len, f"sequence length {s} exceeds table length {max_len}"
    out_dtype = jnp.dtype(table.dtype if out_dtype is None else out_dtype)

    in_sz = jnp.dtype(table.dtype).itemsize
    out_sz = out_dtype.itemsize
    plane = s * d

    # --- per-generation VMEM byte budget (per live block) -------------------
    vmem_cap = _vmem_capacity_bytes()
    block_budget = min(6 << 20, max(vmem_cap // 10, 1 << 20))

    # --- choose the (rows R, lanes W) layout of the (s, d) plane ------------
    # Natural layout when d is lane-aligned (dense stores, no table slice);
    # otherwise flatten the plane into 128-multiple-wide rows for unmasked
    # stores; only a truly ragged plane (s*d % 128 != 0) keeps masked stores.
    if d % _LANE == 0 and s >= _SUBLANE:
        W, R = d, s
        table_plane = table                      # full table, no host-side slice
        sliced = False
    else:
        if plane % _LANE == 0:
            q = plane // _LANE
            m = next(c for c in (8, 4, 2, 1) if q % c == 0)
            W = _LANE * m                        # lane-dense flattened rows
        else:
            W = d                                # ragged fallback: masked stores
        R = plane // W
        table_plane = table[:s].reshape(R, W)    # slice only in the ragged case
        sliced = True

    # --- fold batch into the output block when it fits the budget -----------
    fold = b * min(R, _SUBLANE) * W * out_sz <= block_budget

    out_row_bytes = (b if fold else 1) * W * out_sz
    max_rows = max(1, block_budget // max(W * in_sz, out_row_bytes))
    if sliced:
        tr = min(R, max(_SUBLANE, _round_down(max_rows, _SUBLANE)))
    else:
        tr = min(_round_down(s, _SUBLANE),
                 max(_SUBLANE, _round_down(max_rows, _SUBLANE)))
    num_row_tiles = pl.cdiv(R, tr)

    # --- v7x megacore: keep >= 2 parallel grid steps when the output is big -
    if (fold and num_row_tiles == 1 and R >= 2 * _SUBLANE
            and b * R * W * out_sz > (1 << 20)):
        tr = _round_up(pl.cdiv(R, 2), _SUBLANE)
        num_row_tiles = pl.cdiv(R, tr)

    # --- specs / grid --------------------------------------------------------
    kernel = _make_pos_emb_kernel(scale)
    if fold:
        grid = (num_row_tiles,)
        in_specs = [pl.BlockSpec((tr, W), lambda ri: (ri, 0))]
        out_specs = pl.BlockSpec((b, tr, W), lambda ri: (0, ri, 0))
        semantics = ("parallel",)
    else:
        # Batch innermost: the table row-block index is unchanged across the
        # batch axis, so its DMA is issued once per row tile and reused.
        grid = (num_row_tiles, b)
        in_specs = [pl.BlockSpec((tr, W), lambda ri, bi: (ri, 0))]
        out_specs = pl.BlockSpec((None, tr, W), lambda ri, bi: (bi, ri, 0))
        semantics = ("parallel", "parallel")

    in_block_bytes = tr * W * in_sz
    out_block_bytes = (b if fold else 1) * tr * W * out_sz
    needed = 2 * (in_block_bytes + out_block_bytes) + (2 << 20)
    vmem_limit = int(min(max(needed, 32 << 20), max(vmem_cap - (8 << 20), 16 << 20)))

    out = pl.pallas_call(
        kernel,
        out_shape=jax.ShapeDtypeStruct((b, R, W), out_dtype),
        grid=grid,
        in_specs=in_specs,
        out_specs=out_specs,
        compiler_params=pltpu.CompilerParams(
            dimension_semantics=semantics,
            vmem_limit_bytes=vmem_limit,
        ),
    )(table_plane)
    return out.reshape(b, s, d)


# ---------------------------------------------------------------------------
# Plain-JAX reference (matches the PyTorch forward)
# ---------------------------------------------------------------------------
def positional_embedding_reference(
    x: jnp.ndarray, table: jnp.ndarray, *, scale: float = 1.0
) -> jnp.ndarray:
    b, s = int(x.shape[0]), int(x.shape[1])
    positions = jnp.broadcast_to(jnp.arange(s)[None, :], (b, s))      # (b, s)
    emb = jnp.take(table, positions.reshape(-1), axis=0) * scale      # (b*s, d)
    return emb.reshape(b, s, table.shape[1])


# ---------------------------------------------------------------------------
# Smoke test
# ---------------------------------------------------------------------------
if __name__ == "__main__":
    key = jax.random.PRNGKey(0)
    k_x, k_w = jax.random.split(key)

    b, s, hidden = 2, 8, 32
    max_length = 64

    # The module only consumes x.shape[:2]; make a deterministic dummy x.
    x = jax.random.normal(k_x, (b, s, hidden), dtype=jnp.float32)

    sin_table = make_sinusoidal_table(max_length, hidden)
    learned_table = make_learned_table(k_w, max_length, hidden)

    out_sin = positional_embedding_forward(x, sin_table)
    out_learned = positional_embedding_forward(x, learned_table)
    out_sin, out_learned = jax.block_until_ready((out_sin, out_learned))

    ref_sin = positional_embedding_reference(x, sin_table)
    ref_learned = positional_embedding_reference(x, learned_table)

    assert out_sin.shape == (b, s, hidden), out_sin.shape
    assert out_learned.shape == (b, s, hidden), out_learned.shape
    assert out_sin.dtype == jnp.float32 and out_learned.dtype == jnp.float32
    assert jnp.allclose(out_sin, ref_sin, atol=1e-6, rtol=1e-6), "sinusoidal mismatch"
    assert jnp.allclose(out_learned, ref_learned, atol=1e-6, rtol=1e-6), "learned mismatch"

    # Ragged plane (s*d not a multiple of 128) exercises the masked fallback.
    x2 = jax.random.normal(k_x, (3, 5, hidden), dtype=jnp.float32)
    out2 = jax.block_until_ready(positional_embedding_forward(x2, learned_table))
    ref2 = positional_embedding_reference(x2, learned_table)
    assert out2.shape == (3, 5, hidden)
    assert jnp.allclose(out2, ref2, atol=1e-6, rtol=1e-6), "ragged mismatch"

    # Optional bf16 output path (cast hidden under the output DMA).
    out_bf16 = jax.block_until_ready(
        positional_embedding_forward(x, sin_table, out_dtype=jnp.bfloat16))
    assert out_bf16.dtype == jnp.bfloat16
    assert jnp.allclose(out_bf16.astype(jnp.float32), ref_sin, atol=2e-2, rtol=2e-2)

    print("KERNEL_OK")
</pallas_src>

<mosaic_0001>
module attributes {stable_mosaic.version = 11 : i64} {
  func.func @kernel(%arg0: i32, %arg1: memref<1x256xf32, #tpu.memory_space<vmem>>, %arg2: memref<2x1x256xf32, #tpu.memory_space<vmem>>) attributes {dimension_semantics = [#tpu.dimension_semantics<parallel>], iteration_bounds = array<i64: 1>, scalar_prefetch = 0 : i64, scratch_operands = 0 : i64, tpu.core_type = #tpu.core_type<tc>, window_params = [{transform_indices = @transform_0, window_bounds = array<i64: 1, 256>}, {transform_indices = @transform_1, window_bounds = array<i64: 2, 1, 256>}]} {
    %c0 = arith.constant 0 : index
    %c0_0 = arith.constant 0 : index
    %0 = vector.load %arg1[%c0, %c0_0] : memref<1x256xf32, #tpu.memory_space<vmem>>, vector<1x256xf32>
    %1 = vector.shape_cast %0 : vector<1x256xf32> to vector<1x1x256xf32>
    %2 = vector.broadcast %1 : vector<1x1x256xf32> to vector<2x1x256xf32>
    %c0_1 = arith.constant 0 : index
    %c0_2 = arith.constant 0 : index
    %c0_3 = arith.constant 0 : index
    %3 = vector.load %arg2[%c0_1, %c0_2, %c0_3] : memref<2x1x256xf32, #tpu.memory_space<vmem>>, vector<2x1x256xf32>
    tpu.vector_store %arg2[%c0_1, %c0_2, %c0_3], %2 {strides = array<i32>} : memref<2x1x256xf32, #tpu.memory_space<vmem>>, vector<2x1x256xf32>,
    return
  }
  func.func @transform_0(%arg0: i32) -> (i32, i32) {
    %c0_i32 = arith.constant 0 : i32
    %c0_i32_0 = arith.constant 0 : i32
    return %arg0, %c0_i32 : i32, i32
  }
  func.func @transform_1(%arg0: i32) -> (i32, i32, i32) {
    %c0_i32 = arith.constant 0 : i32
    %c0_i32_0 = arith.constant 0 : i32
    %c0_i32_1 = arith.constant 0 : i32
    return %c0_i32, %arg0, %c0_i32_0 : i32, i32, i32
  }
}

</mosaic_0001>

<llo_original>
// kernel: tpu_custom_call.1
$region0: #{tpu_custom_call.1}
  #allocation0 [shape = 'u32[]', space=smem, size = 0x4, offset = 0x4, fixed_abs, tag = 'smem constant byte address 0x4 - core index']
  #allocation1 [shape = 'u32[144,128]{1,0:T(1,128)}', space=vmem, size = 0x12000, scoped, tag = 'internal scratch']
  %s0 = inlined_call_operand.hbm [shape: f32[1,256], index: 0, kind: input, shape index: {}]
  %s1 = inlined_call_operand.hbm [shape: f32[2,1,256], index: 1, kind: output, shape index: {}]
  %s2 = sld [smem:[#allocation0]]
  $region18: #{tpu_custom_call.1} parent=0
    _
  %s4 = ssub.s32 1, %s2
  %s5 = scalar_select 0, %s4, %s2
  $region1: #{tpu_custom_call.1} parent=0
    #allocation2 [shape = 'u8[1024]{0}', space=vmem, size = 0x400, scoped, tag = 'input window, operand 0, single buffered']
    #allocation3 [shape = 's32[1]{0}', space=sflag, size = 0x4, scoped, tag = 'scoped memory for tpu_custom_call.1']
    #allocation4 [shape = 's32[1]{0}', space=sflag, size = 0x4, scoped, tag = 'scoped memory for tpu_custom_call.1']
    #allocation5 [shape = 'u8[2048]{0}', space=vmem, size = 0x800, scoped, tag = 'output window, operand 0, single buffered']
    %6 = vsyncpa [#allocation3], 0
    %7 = vsyncpa [#allocation4], 0
    // Predicated region
    $region2: #{tpu_custom_call.1} parent=1 // pred_check
      _
    $region3: #{tpu_custom_call.1} parent=1 // pred_check_branch
      %9 = sbr.rel (0) target = $region5
    $region4: #{tpu_custom_call.1} parent=1 // pred_region
      %s11 = ssub.s32 32, 32
      %12 = vsyncadd [#allocation3], %s11
      %s14 = sshll.u32 [#allocation2], 4
      %s15 = int_to_ptr.vmem [resolvable:$true] %s14
      %17 = dma.hbm_to_vmem [thread:$0]  %s0, 32, %s15, [#allocation3]
    $region5: #{tpu_custom_call.1} parent=1 // pred_fallthru
      _
    // Predicated region
    $region6: #{tpu_custom_call.1} parent=1 // pred_check
      _
    $region7: #{tpu_custom_call.1} parent=1 // pred_check_branch
      %19 = sbr.rel (0) target = $region9
    $region8: #{tpu_custom_call.1} parent=1 // pred_region
      %20 = dma.done [#allocation3], 32
    $region9: #{tpu_custom_call.1} parent=1 // pred_fallthru
      _
    %v21 = vld [vmem:[#allocation2] sm:$0x3]
    %v22 = vlaneseq
    %vm23 = vcmp.ge.s32.totalorder %v22, 0
    %vm24 = vcmp.lt.s32.totalorder %v22, 256
    %vm25 = vmand %vm23, %vm24
    %26 = vst.msk [vmem:[#allocation5] sm:$0x3] %vm25, %v21
    %27 = vst.msk [vmem:[#allocation5 + $0x2] sm:$0x3] %vm25, %v21
    // Predicated region
    $region10: #{tpu_custom_call.1} parent=1 // pred_check
      _
    $region11: #{tpu_custom_call.1} parent=1 // pred_check_branch
      %29 = sbr.rel (0) target = $region13
    $region12: #{tpu_custom_call.1} parent=1 // pred_region
      %s31 = ssub.s32 64, 64
      %32 = vsyncadd [#allocation4], %s31
      %s33 = sshll.u32 [#allocation5], 4
      %s34 = int_to_ptr.vmem [resolvable:$true] %s33
      %39 = dma.vmem_to_hbm [thread:$0]  %s34, 64, %s1, [#allocation4], 32, 32, 2
    $region13: #{tpu_custom_call.1} parent=1 // pred_fallthru
      _
    // Predicated region
    $region14: #{tpu_custom_call.1} parent=1 // pred_check
      _
    $region15: #{tpu_custom_call.1} parent=1 // pred_check_branch
      %41 = sbr.rel (0) target = $region17
    $region16: #{tpu_custom_call.1} parent=1 // pred_region
      %42 = dma.done [#allocation4], 64
    $region17: #{tpu_custom_call.1} parent=1 // pred_fallthru
      _
    %43 = vsyncpa [#allocation3], 1
    %44 = vsyncpa [#allocation4], 1

</llo_original>
